<compile_context>
chip_gen: v6e
topology: v6e:2x2x1
jax: 0.10.0
libtpu: 0.0.40
codegen_flags: <defaults>
</compile_context>

<pallas_src>
import functools

import jax
import jax.numpy as jnp
from jax.experimental import pallas as pl
from jax.experimental.pallas import tpu as pltpu


C_IN = 100   # input channels of query / library
C_MID = 50   # hidden channels after cnn_lib_2 / cnn_q_1
C_OUT = 1    # output channels of merge layer
EPS = 1e-5   # BatchNorm2d default eps


def searchnet_kernel(q_ref, lib_ref,
                     w1_ref, b1_ref,    # cnn_lib_1 : 100 -> 100
                     w2_ref, b2_ref,    # cnn_lib_2 : 100 -> 50
                     wq_ref, bq_ref,    # cnn_q_1   : 100 -> 50
                     wm_ref, bm_ref,    # merge     : 50  -> 1
                     o_ref):
    # Activations: channels on sublanes, pixels on lanes.  bf16 for the MXU.
    q = q_ref[...].astype(jnp.bfloat16)      # [100, TP]
    lib = lib_ref[...].astype(jnp.bfloat16)  # [100, TP]

    # cnn_lib_1: 1x1 conv (BN scale pre-folded into W) + shift + ReLU
    h1 = jnp.dot(w1_ref[...], lib, preferred_element_type=jnp.float32)  # [100, TP]
    h1 = jnp.maximum(h1 + b1_ref[...], 0.0)

    # cnn_lib_2
    h2 = jnp.dot(w2_ref[...], h1.astype(jnp.bfloat16),
                 preferred_element_type=jnp.float32)                    # [50, TP]
    h2 = jnp.maximum(h2 + b2_ref[...], 0.0)

    # cnn_q_1
    hq = jnp.dot(wq_ref[...], q, preferred_element_type=jnp.float32)    # [50, TP]
    hq = jnp.maximum(hq + bq_ref[...], 0.0)

    # merge = query + library ; merge layer (50 -> 1) as VPU mul + sublane reduce
    m = hq + h2                                                         # [50, TP]
    out = jnp.sum(m * wm_ref[...], axis=0, keepdims=True)               # [1, TP]
    out = jnp.maximum(out + bm_ref[...], 0.0)

    o_ref[...] = out.astype(o_ref.dtype)


def _round_up(x, m):
    return (x + m - 1) // m * m


def _fold_bn(w_oi, conv_bias, gamma, beta, mean, var):
    """Fold conv bias + eval-mode BN into the weight and a per-channel shift."""
    inv = gamma / jnp.sqrt(var + EPS)                # [outc]
    w_folded = w_oi * inv[:, None]                   # [outc, inc]
    shift = (conv_bias - mean) * inv + beta          # [outc]
    return w_folded, shift


@functools.partial(jax.jit, static_argnames=("tile_p",))
def searchnet_forward(query, library, params, tile_p=512):
    """query, library: NCHW float32 [B, 100, H, W] -> out NCHW [B, 1, H, W]."""
    B, C, H, W = query.shape
    assert C == C_IN and library.shape == query.shape
    assert tile_p % 128 == 0
    HW = H * W

    # NCHW -> [B, C, H*W]: pure reshape, no transpose / extra HBM traffic.
    q3 = query.reshape(B, C_IN, HW)
    l3 = library.reshape(B, C_IN, HW)

    # Pixel tile: clamp to padded spatial extent, keep a multiple of 128 lanes.
    tp = min(tile_p, _round_up(HW, 128))
    HW_pad = _round_up(HW, tp)
    if HW_pad != HW:
        pad = ((0, 0), (0, 0), (0, HW_pad - HW))
        q3 = jnp.pad(q3, pad)
        l3 = jnp.pad(l3, pad)

    # Fold BatchNorm (eval mode) into weights / shifts; bf16 weights for the MXU.
    (w1, b1), (w2, b2), (wq, bq), (wm, bm) = [_fold_bn(*p) for p in params]
    w1 = w1.astype(jnp.bfloat16)
    w2 = w2.astype(jnp.bfloat16)
    wq = wq.astype(jnp.bfloat16)
    b1 = b1.reshape(C_IN, 1)
    b2 = b2.reshape(C_MID, 1)
    bq = bq.reshape(C_MID, 1)
    wm_col = wm.reshape(C_MID, 1)   # stays f32: used on the VPU, not the MXU
    bm_s = bm.reshape(1, 1)

    grid = (B, HW_pad // tp)

    def act_spec():
        return pl.BlockSpec((None, C_IN, tp), lambda b, p: (b, 0, p))

    def full_spec(r, c):
        return pl.BlockSpec((r, c), lambda b, p: (0, 0))

    out3 = pl.pallas_call(
        searchnet_kernel,
        out_shape=jax.ShapeDtypeStruct((B, C_OUT, HW_pad), jnp.float32),
        grid=grid,
        in_specs=[
            act_spec(), act_spec(),
            full_spec(C_IN, C_IN), full_spec(C_IN, 1),
            full_spec(C_MID, C_IN), full_spec(C_MID, 1),
            full_spec(C_MID, C_IN), full_spec(C_MID, 1),
            full_spec(C_MID, 1), full_spec(1, 1),
        ],
        out_specs=pl.BlockSpec((None, C_OUT, tp), lambda b, p: (b, 0, p)),
        compiler_params=pltpu.CompilerParams(
            dimension_semantics=("parallel", "parallel")),
    )(q3, l3, w1, b1, w2, b2, wq, bq, wm_col, bm_s)

    if HW_pad != HW:
        out3 = out3[:, :, :HW]
    return out3.reshape(B, C_OUT, H, W)


def make_layer_params(key, inc, outc):
    """Deterministic Conv2d(1x1) + BatchNorm2d parameters (PyTorch-style init)."""
    k = jax.random.split(key, 6)
    bound = 1.0 / jnp.sqrt(float(inc))
    # PyTorch conv weight is [outc, inc, 1, 1]; stored here as [outc, inc]
    w = jax.random.uniform(k[0], (outc, inc), jnp.float32, -bound, bound)
    cbias = jax.random.uniform(k[1], (outc,), jnp.float32, -bound, bound)
    gamma = 1.0 + 0.1 * jax.random.normal(k[2], (outc,), jnp.float32)
    beta = 0.1 * jax.random.normal(k[3], (outc,), jnp.float32)
    mean = 0.1 * jax.random.normal(k[4], (outc,), jnp.float32)
    var = jax.random.uniform(k[5], (outc,), jnp.float32, 0.5, 1.5)
    return w, cbias, gamma, beta, mean, var


def reference_forward(query, library, params):
    """Plain-JAX f32 reference of the same eval-mode forward (for validation)."""
    def layer(x, p):                       # x: [B, C, H, W]
        w, b, gamma, beta, mean, var = p
        y = jnp.einsum('oc,bchw->bohw', w, x) + b[None, :, None, None]
        inv = gamma / jnp.sqrt(var + EPS)
        y = (y - mean[None, :, None, None]) * inv[None, :, None, None] \
            + beta[None, :, None, None]
        return jnp.maximum(y, 0.0)
    lib = layer(layer(library, params[0]), params[1])
    q = layer(query, params[2])
    return layer(q + lib, params[3])


if __name__ == "__main__":
    key = jax.random.PRNGKey(0)
    k_q, k_l, k1, k2, k3, k4 = jax.random.split(key, 6)

    B, H, W = 2, 16, 16
    query = jax.random.normal(k_q, (B, C_IN, H, W), jnp.float32)
    library = jax.random.normal(k_l, (B, C_IN, H, W), jnp.float32)

    params = (
        make_layer_params(k1, C_IN, C_IN),    # cnn_lib_1
        make_layer_params(k2, C_IN, C_MID),   # cnn_lib_2
        make_layer_params(k3, C_IN, C_MID),   # cnn_q_1
        make_layer_params(k4, C_MID, C_OUT),  # merge
    )

    out = searchnet_forward(query, library, params)
    out = jax.block_until_ready(out)

    ref = reference_forward(query, library, params)
    assert out.shape == (B, 1, H, W), out.shape
    # bf16 MXU inputs (f32 accumulation) -> relaxed tolerance vs f32 reference.
    max_diff = float(jnp.max(jnp.abs(out - ref)))
    assert jnp.allclose(out, ref, atol=3e-2, rtol=3e-2), (
        f"mismatch vs reference: max abs diff {max_diff}")

    print("KERNEL_OK")
</pallas_src>

<mosaic_0001>
module attributes {stable_mosaic.version = 11 : i64} {
  func.func @searchnet_kernel(%arg0: i32, %arg1: i32, %arg2: memref<1x100x256xf32, #tpu.memory_space<vmem>>, %arg3: memref<1x100x256xf32, #tpu.memory_space<vmem>>, %arg4: memref<100x100xbf16, #tpu.memory_space<vmem>>, %arg5: memref<100x1xf32, #tpu.memory_space<vmem>>, %arg6: memref<50x100xbf16, #tpu.memory_space<vmem>>, %arg7: memref<50x1xf32, #tpu.memory_space<vmem>>, %arg8: memref<50x100xbf16, #tpu.memory_space<vmem>>, %arg9: memref<50x1xf32, #tpu.memory_space<vmem>>, %arg10: memref<50x1xf32, #tpu.memory_space<vmem>>, %arg11: memref<1x1xf32, #tpu.memory_space<vmem>>, %arg12: memref<1x1x256xf32, #tpu.memory_space<vmem>>) attributes {dimension_semantics = [#tpu.dimension_semantics<parallel>, #tpu.dimension_semantics<parallel>], iteration_bounds = array<i64: 2, 1>, scalar_prefetch = 0 : i64, scratch_operands = 0 : i64, tpu.core_type = #tpu.core_type<tc>, window_params = [{transform_indices = @transform_0, window_bounds = array<i64: 1, 100, 256>}, {transform_indices = @transform_1, window_bounds = array<i64: 1, 100, 256>}, {pipeline_mode = #tpu.pipeline_mode<synchronous>, transform_indices = @transform_2, window_bounds = array<i64: 100, 100>}, {pipeline_mode = #tpu.pipeline_mode<synchronous>, transform_indices = @transform_3, window_bounds = array<i64: 100, 1>}, {pipeline_mode = #tpu.pipeline_mode<synchronous>, transform_indices = @transform_4, window_bounds = array<i64: 50, 100>}, {pipeline_mode = #tpu.pipeline_mode<synchronous>, transform_indices = @transform_5, window_bounds = array<i64: 50, 1>}, {pipeline_mode = #tpu.pipeline_mode<synchronous>, transform_indices = @transform_6, window_bounds = array<i64: 50, 100>}, {pipeline_mode = #tpu.pipeline_mode<synchronous>, transform_indices = @transform_7, window_bounds = array<i64: 50, 1>}, {pipeline_mode = #tpu.pipeline_mode<synchronous>, transform_indices = @transform_8, window_bounds = array<i64: 50, 1>}, {pipeline_mode = #tpu.pipeline_mode<synchronous>, transform_indices = @transform_9, window_bounds = array<i64: 1, 1>}, {transform_indices = @transform_10, window_bounds = array<i64: 1, 1, 256>}]} {
    %c0 = arith.constant 0 : index
    %c0_0 = arith.constant 0 : index
    %c0_1 = arith.constant 0 : index
    %0 = vector.load %arg2[%c0, %c0_0, %c0_1] : memref<1x100x256xf32, #tpu.memory_space<vmem>>, vector<1x100x256xf32>
    %1 = vector.shape_cast %0 : vector<1x100x256xf32> to vector<100x256xf32>
    %2 = arith.truncf %1 : vector<100x256xf32> to vector<100x256xbf16>
    %c0_2 = arith.constant 0 : index
    %c0_3 = arith.constant 0 : index
    %c0_4 = arith.constant 0 : index
    %3 = vector.load %arg3[%c0_2, %c0_3, %c0_4] : memref<1x100x256xf32, #tpu.memory_space<vmem>>, vector<1x100x256xf32>
    %4 = vector.shape_cast %3 : vector<1x100x256xf32> to vector<100x256xf32>
    %5 = arith.truncf %4 : vector<100x256xf32> to vector<100x256xbf16>
    %c0_5 = arith.constant 0 : index
    %c0_6 = arith.constant 0 : index
    %6 = vector.load %arg4[%c0_5, %c0_6] : memref<100x100xbf16, #tpu.memory_space<vmem>>, vector<100x100xbf16>
    %cst = arith.constant dense<0.000000e+00> : vector<100x256xf32>
    %7 = tpu.matmul %6, %5, %cst {dimension_numbers = #tpu.dot_dimension_numbers<[1], [0], [0], [1], [0, 0, 1, 1], [], []>} : vector<100x100xbf16>, vector<100x256xbf16>, vector<100x256xf32> -> vector<100x256xf32>
    %c0_7 = arith.constant 0 : index
    %c0_8 = arith.constant 0 : index
    %8 = vector.load %arg5[%c0_7, %c0_8] : memref<100x1xf32, #tpu.memory_space<vmem>>, vector<100x1xf32>
    %9 = vector.broadcast %8 : vector<100x1xf32> to vector<100x256xf32>
    %10 = arith.addf %7, %9 : vector<100x256xf32>
    %cst_9 = arith.constant 0.000000e+00 : f32
    %11 = vector.broadcast %cst_9 : f32 to vector<100x256xf32>
    %12 = arith.maximumf %10, %11 : vector<100x256xf32>
    %c0_10 = arith.constant 0 : index
    %c0_11 = arith.constant 0 : index
    %13 = vector.load %arg6[%c0_10, %c0_11] : memref<50x100xbf16, #tpu.memory_space<vmem>>, vector<50x100xbf16>
    %14 = arith.truncf %12 : vector<100x256xf32> to vector<100x256xbf16>
    %cst_12 = arith.constant dense<0.000000e+00> : vector<50x256xf32>
    %15 = tpu.matmul %13, %14, %cst_12 {dimension_numbers = #tpu.dot_dimension_numbers<[1], [0], [0], [1], [0, 0, 1, 1], [], []>} : vector<50x100xbf16>, vector<100x256xbf16>, vector<50x256xf32> -> vector<50x256xf32>
    %c0_13 = arith.constant 0 : index
    %c0_14 = arith.constant 0 : index
    %16 = vector.load %arg7[%c0_13, %c0_14] : memref<50x1xf32, #tpu.memory_space<vmem>>, vector<50x1xf32>
    %17 = vector.broadcast %16 : vector<50x1xf32> to vector<50x256xf32>
    %18 = arith.addf %15, %17 : vector<50x256xf32>
    %cst_15 = arith.constant 0.000000e+00 : f32
    %19 = vector.broadcast %cst_15 : f32 to vector<50x256xf32>
    %20 = arith.maximumf %18, %19 : vector<50x256xf32>
    %c0_16 = arith.constant 0 : index
    %c0_17 = arith.constant 0 : index
    %21 = vector.load %arg8[%c0_16, %c0_17] : memref<50x100xbf16, #tpu.memory_space<vmem>>, vector<50x100xbf16>
    %cst_18 = arith.constant dense<0.000000e+00> : vector<50x256xf32>
    %22 = tpu.matmul %21, %2, %cst_18 {dimension_numbers = #tpu.dot_dimension_numbers<[1], [0], [0], [1], [0, 0, 1, 1], [], []>} : vector<50x100xbf16>, vector<100x256xbf16>, vector<50x256xf32> -> vector<50x256xf32>
    %c0_19 = arith.constant 0 : index
    %c0_20 = arith.constant 0 : index
    %23 = vector.load %arg9[%c0_19, %c0_20] : memref<50x1xf32, #tpu.memory_space<vmem>>, vector<50x1xf32>
    %24 = vector.broadcast %23 : vector<50x1xf32> to vector<50x256xf32>
    %25 = arith.addf %22, %24 : vector<50x256xf32>
    %cst_21 = arith.constant 0.000000e+00 : f32
    %26 = vector.broadcast %cst_21 : f32 to vector<50x256xf32>
    %27 = arith.maximumf %25, %26 : vector<50x256xf32>
    %28 = arith.addf %27, %20 : vector<50x256xf32>
    %c0_22 = arith.constant 0 : index
    %c0_23 = arith.constant 0 : index
    %29 = vector.load %arg10[%c0_22, %c0_23] : memref<50x1xf32, #tpu.memory_space<vmem>>, vector<50x1xf32>
    %30 = vector.broadcast %29 : vector<50x1xf32> to vector<50x256xf32>
    %31 = arith.mulf %28, %30 : vector<50x256xf32>
    %cst_24 = arith.constant dense<0.000000e+00> : vector<256xf32>
    %32 = vector.multi_reduction <add>, %31, %cst_24 [0] : vector<50x256xf32> to vector<256xf32>
    %33 = vector.shape_cast %32 : vector<256xf32> to vector<1x256xf32>
    %c0_25 = arith.constant 0 : index
    %c0_26 = arith.constant 0 : index
    %34 = vector.load %arg11[%c0_25, %c0_26] : memref<1x1xf32, #tpu.memory_space<vmem>>, vector<1x1xf32>
    %35 = vector.broadcast %34 : vector<1x1xf32> to vector<1x256xf32>
    %36 = arith.addf %33, %35 : vector<1x256xf32>
    %cst_27 = arith.constant 0.000000e+00 : f32
    %37 = vector.broadcast %cst_27 : f32 to vector<1x256xf32>
    %38 = arith.maximumf %36, %37 : vector<1x256xf32>
    %c0_28 = arith.constant 0 : index
    %c0_29 = arith.constant 0 : index
    %c0_30 = arith.constant 0 : index
    %39 = vector.load %arg12[%c0_28, %c0_29, %c0_30] : memref<1x1x256xf32, #tpu.memory_space<vmem>>, vector<1x1x256xf32>
    %40 = vector.shape_cast %39 : vector<1x1x256xf32> to vector<1x256xf32>
    %41 = vector.shape_cast %38 : vector<1x256xf32> to vector<1x1x256xf32>
    tpu.vector_store %arg12[%c0_28, %c0_29, %c0_30], %41 {strides = array<i32>} : memref<1x1x256xf32, #tpu.memory_space<vmem>>, vector<1x1x256xf32>,
    return
  }
  func.func @transform_0(%arg0: i32, %arg1: i32) -> (i32, i32, i32) {
    %c0_i32 = arith.constant 0 : i32
    %c0_i32_0 = arith.constant 0 : i32
    return %arg0, %c0_i32, %arg1 : i32, i32, i32
  }
  func.func @transform_1(%arg0: i32, %arg1: i32) -> (i32, i32, i32) {
    %c0_i32 = arith.constant 0 : i32
    %c0_i32_0 = arith.constant 0 : i32
    return %arg0, %c0_i32, %arg1 : i32, i32, i32
  }
  func.func @transform_2(%arg0: i32, %arg1: i32) -> (i32, i32) {
    %c0_i32 = arith.constant 0 : i32
    %c0_i32_0 = arith.constant 0 : i32
    %c0_i32_1 = arith.constant 0 : i32
    return %c0_i32, %c0_i32_0 : i32, i32
  }
  func.func @transform_3(%arg0: i32, %arg1: i32) -> (i32, i32) {
    %c0_i32 = arith.constant 0 : i32
    %c0_i32_0 = arith.constant 0 : i32
    %c0_i32_1 = arith.constant 0 : i32
    return %c0_i32, %c0_i32_0 : i32, i32
  }
  func.func @transform_4(%arg0: i32, %arg1: i32) -> (i32, i32) {
    %c0_i32 = arith.constant 0 : i32
    %c0_i32_0 = arith.constant 0 : i32
    %c0_i32_1 = arith.constant 0 : i32
    return %c0_i32, %c0_i32_0 : i32, i32
  }
  func.func @transform_5(%arg0: i32, %arg1: i32) -> (i32, i32) {
    %c0_i32 = arith.constant 0 : i32
    %c0_i32_0 = arith.constant 0 : i32
    %c0_i32_1 = arith.constant 0 : i32
    return %c0_i32, %c0_i32_0 : i32, i32
  }
  func.func @transform_6(%arg0: i32, %arg1: i32) -> (i32, i32) {
    %c0_i32 = arith.constant 0 : i32
    %c0_i32_0 = arith.constant 0 : i32
    %c0_i32_1 = arith.constant 0 : i32
    return %c0_i32, %c0_i32_0 : i32, i32
  }
  func.func @transform_7(%arg0: i32, %arg1: i32) -> (i32, i32) {
    %c0_i32 = arith.constant 0 : i32
    %c0_i32_0 = arith.constant 0 : i32
    %c0_i32_1 = arith.constant 0 : i32
    return %c0_i32, %c0_i32_0 : i32, i32
  }
  func.func @transform_8(%arg0: i32, %arg1: i32) -> (i32, i32) {
    %c0_i32 = arith.constant 0 : i32
    %c0_i32_0 = arith.constant 0 : i32
    %c0_i32_1 = arith.constant 0 : i32
    return %c0_i32, %c0_i32_0 : i32, i32
  }
  func.func @transform_9(%arg0: i32, %arg1: i32) -> (i32, i32) {
    %c0_i32 = arith.constant 0 : i32
    %c0_i32_0 = arith.constant 0 : i32
    %c0_i32_1 = arith.constant 0 : i32
    return %c0_i32, %c0_i32_0 : i32, i32
  }
  func.func @transform_10(%arg0: i32, %arg1: i32) -> (i32, i32, i32) {
    %c0_i32 = arith.constant 0 : i32
    %c0_i32_0 = arith.constant 0 : i32
    return %arg0, %c0_i32, %arg1 : i32, i32, i32
  }
}

</mosaic_0001>

<llo_original>
// kernel: searchnet_forward.1
$region0: #{searchnet_forward.1}
  #allocation0 [shape = 'u32[]', space=smem, size = 0x4, offset = 0x4, fixed_abs, tag = 'smem constant byte address 0x4 - core index']
  #allocation1 [shape = 'u32[144,128]{1,0:T(1,128)}', space=vmem, size = 0x12000, scoped, tag = 'internal scratch']
  #allocation2 [shape = 'f32[1,1]{1,0:T(1,128)S(1)}', space=vmem, size = 0x200, scoped, tag = 'scoped memory for searchnet_forward.1']
  %s0 = inlined_call_operand.vmem [shape: f32[2,100,256], index: 0, kind: input, shape index: {}]
  %s1 = inlined_call_operand.vmem [shape: f32[2,100,256], index: 1, kind: input, shape index: {}]
  %s2 = inlined_call_operand.vmem [shape: bf16[100,100], index: 2, kind: input, shape index: {}]
  %s3 = inlined_call_operand.vmem [shape: f32[100,1], index: 3, kind: input, shape index: {}]
  %s4 = inlined_call_operand.vmem [shape: bf16[50,100], index: 4, kind: input, shape index: {}]
  %s5 = inlined_call_operand.vmem [shape: f32[50,1], index: 5, kind: input, shape index: {}]
  %s6 = inlined_call_operand.vmem [shape: bf16[50,100], index: 6, kind: input, shape index: {}]
  %s7 = inlined_call_operand.vmem [shape: f32[50,1], index: 7, kind: input, shape index: {}]
  %s8 = inlined_call_operand.vmem [shape: f32[50,1], index: 8, kind: input, shape index: {}]
  %s9 = inlined_call_operand.<no memory space> [shape: f32[1,1], index: 9, kind: input, shape index: {}]
  %s10 = inlined_call_operand.vmem [shape: f32[2,1,256], index: 10, kind: output, shape index: {}]
  %s11 = sld [smem:[#allocation0]]
  $region73: #{searchnet_forward.1} parent=0
    _
  %s13 = ssub.s32 1, %s11
  %s14 = scalar_select 0, %s13, %s11
  %v15 = vstv %s9
  %16 = vst [vmem:[#allocation2] sm:$0x1] %v15
  loop: start=0, step=1, limit=4
  $region2: #{searchnet_forward.1} parent=0 // loop_pre_header
    _
  $region3: #{searchnet_forward.1} parent=0 // loop_header
    %s18 = sphi 0, %s22
    %p19 = scmp.ge.s32.totalorder %s18, 4
    %s25 = sphi 0, %s37
    %s26 = sphi 0, %s33
    %s27 = sphi 0, %s25
    %s28 = sphi 0, %s26
    %s29 = sphi 0, %s27
    %s30 = sphi 0, %s28
    %s42 = sphi 0, %s44
    %s45 = sphi 0, %s42
    %s46 = sphi 0, %s45
    %s62 = sphi 0, %s46
    %s70 = sphi 0, %s72
    %s73 = sphi 0, %s70
    %s74 = sphi 0, %s73
    %s90 = sphi 0, %s74
    %s94 = sphi 0, %s94
    %s96 = sphi 0, %s94
    %s97 = sphi 0, %s96
    %s111 = sphi 0, %s97
    %s115 = sphi 0, %s115
    %s117 = sphi 0, %s115
    %s118 = sphi 0, %s117
    %s132 = sphi 0, %s118
    %s136 = sphi 0, %s136
    %s138 = sphi 0, %s136
    %s139 = sphi 0, %s138
    %s153 = sphi 0, %s139
    %s157 = sphi 0, %s157
    %s159 = sphi 0, %s157
    %s160 = sphi 0, %s159
    %s174 = sphi 0, %s160
    %s178 = sphi 0, %s178
    %s180 = sphi 0, %s178
    %s181 = sphi 0, %s180
    %s195 = sphi 0, %s181
    %s199 = sphi 0, %s199
    %s201 = sphi 0, %s199
    %s202 = sphi 0, %s201
    %s216 = sphi 0, %s202
    %s220 = sphi 0, %s220
    %s222 = sphi 0, %s220
    %s223 = sphi 0, %s222
    %s237 = sphi 0, %s223
    %s241 = sphi 0, %s241
    %s243 = sphi 0, %s241
    %s244 = sphi 0, %s243
    %s258 = sphi 0, %s244
    %s266 = sphi 0, %s268
    %s269 = sphi 0, %s266
    %s270 = sphi 0, %s269
    %s286 = sphi 0, %s270
  $region4: #{searchnet_forward.1} parent=0 // loop_header_branch
    %21 = sbr.rel (%p19) target = $region8
  $region5: #{searchnet_forward.1} parent=0 // loop_body
    %s23 = ssub.s32 %s18, 1
    %s24 = ssub.s32 %s18, 2
    %s31 = sadd.s32 1, %s26
    %p32 = scmp.ge.s32.totalorder %s31, 1
    %s33 = scalar_select %p32, 0, %s31
    %s34 = sadd.s32 1, %s25
    %s35 = scalar_select %p32, %s34, %s25
    %p36 = scmp.ge.s32.totalorder %s35, 2
    %s37 = scalar_select %p36, 0, %s35
    %s38 = ssub.s32 %s25, %s37
    %s39 = ssub.s32 %s26, %s33
    %s40 = sor.u32 %s38, %s39
    %p41 = scmp.eq.s32.totalorder %s40, 0
    %s43 = sadd.s32 %s42, 1
    %s44 = scalar_select %p41, %s42, %s43
    %p47 = pneg %p41
    %p48 = scmp.eq.s32.totalorder %s18, 1
    %p49 = por %p47, %p48
    %p50 = scmp.ne.s32.totalorder %s42, %s45
    %p51 = scmp.eq.s32.totalorder %s18, 0
    %p52 = por %p50, %p51
    %p53 = scmp.ne.s32.totalorder %s42, %s45
    %p54 = scmp.eq.s32.totalorder %s23, 1
    %p55 = por %p53, %p54
    %p56 = scmp.ne.s32.totalorder %s45, %s46
    %p57 = scmp.eq.s32.totalorder %s23, 0
    %p58 = por %p56, %p57
    %p59 = scmp.ne.s32.totalorder %s45, %s46
    %p60 = scmp.eq.s32.totalorder %s24, 1
    %p61 = por %p59, %p60
    %p63 = scmp.ne.s32.totalorder %s46, %s62
    %p64 = scmp.eq.s32.totalorder %s24, 0
    %p65 = por %p63, %p64
    %s66 = ssub.s32 %s25, %s37
    %s67 = ssub.s32 %s26, %s33
    %s68 = sor.u32 %s66, %s67
    %p69 = scmp.eq.s32.totalorder %s68, 0
    %s71 = sadd.s32 %s70, 1
    %s72 = scalar_select %p69, %s70, %s71
    %p75 = pneg %p69
    %p76 = scmp.eq.s32.totalorder %s18, 1
    %p77 = por %p75, %p76
    %p78 = scmp.ne.s32.totalorder %s70, %s73
    %p79 = scmp.eq.s32.totalorder %s18, 0
    %p80 = por %p78, %p79
    %p81 = scmp.ne.s32.totalorder %s70, %s73
    %p82 = scmp.eq.s32.totalorder %s23, 1
    %p83 = por %p81, %p82
    %p84 = scmp.ne.s32.totalorder %s73, %s74
    %p85 = scmp.eq.s32.totalorder %s23, 0
    %p86 = por %p84, %p85
    %p87 = scmp.ne.s32.totalorder %s73, %s74
    %p88 = scmp.eq.s32.totalorder %s24, 1
    %p89 = por %p87, %p88
    %p91 = scmp.ne.s32.totalorder %s74, %s90
    %p92 = scmp.eq.s32.totalorder %s24, 0
    %p93 = por %p91, %p92
    %s95 = sadd.s32 %s94, 1
    %p98 = scmp.eq.s32.totalorder %s18, 1
    %p99 = scmp.ne.s32.totalorder %s94, %s96
    %p100 = scmp.eq.s32.totalorder %s18, 0
    %p101 = por %p99, %p100
    %p102 = scmp.ne.s32.totalorder %s94, %s96
    %p103 = scmp.eq.s32.totalorder %s23, 1
    %p104 = por %p102, %p103
    %p105 = scmp.ne.s32.totalorder %s96, %s97
    %p106 = scmp.eq.s32.totalorder %s23, 0
    %p107 = por %p105, %p106
    %p108 = scmp.ne.s32.totalorder %s96, %s97
    %p109 = scmp.eq.s32.totalorder %s24, 1
    %p110 = por %p108, %p109
    %p112 = scmp.ne.s32.totalorder %s97, %s111
    %p113 = scmp.eq.s32.totalorder %s24, 0
    %p114 = por %p112, %p113
    %s116 = sadd.s32 %s115, 1
    %p119 = scmp.eq.s32.totalorder %s18, 1
    %p120 = scmp.ne.s32.totalorder %s115, %s117
    %p121 = scmp.eq.s32.totalorder %s18, 0
    %p122 = por %p120, %p121
    %p123 = scmp.ne.s32.totalorder %s115, %s117
    %p124 = scmp.eq.s32.totalorder %s23, 1
    %p125 = por %p123, %p124
    %p126 = scmp.ne.s32.totalorder %s117, %s118
    %p127 = scmp.eq.s32.totalorder %s23, 0
    %p128 = por %p126, %p127
    %p129 = scmp.ne.s32.totalorder %s117, %s118
    %p130 = scmp.eq.s32.totalorder %s24, 1
    %p131 = por %p129, %p130
    %p133 = scmp.ne.s32.totalorder %s118, %s132
    %p134 = scmp.eq.s32.totalorder %s24, 0
    %p135 = por %p133, %p134
    %s137 = sadd.s32 %s136, 1
    %p140 = scmp.eq.s32.totalorder %s18, 1
    %p141 = scmp.ne.s32.totalorder %s136, %s138
    %p142 = scmp.eq.s32.totalorder %s18, 0
    %p143 = por %p141, %p142
    %p144 = scmp.ne.s32.totalorder %s136, %s138
    %p145 = scmp.eq.s32.totalorder %s23, 1
    %p146 = por %p144, %p145
    %p147 = scmp.ne.s32.totalorder %s138, %s139
    %p148 = scmp.eq.s32.totalorder %s23, 0
    %p149 = por %p147, %p148
    %p150 = scmp.ne.s32.totalorder %s138, %s139
    %p151 = scmp.eq.s32.totalorder %s24, 1
    %p152 = por %p150, %p151
    %p154 = scmp.ne.s32.totalorder %s139, %s153
    %p155 = scmp.eq.s32.totalorder %s24, 0
    %p156 = por %p154, %p155
    %s158 = sadd.s32 %s157, 1
    %p161 = scmp.eq.s32.totalorder %s18, 1
    %p162 = scmp.ne.s32.totalorder %s157, %s159
    %p163 = scmp.eq.s32.totalorder %s18, 0
    %p164 = por %p162, %p163
    %p165 = scmp.ne.s32.totalorder %s157, %s159
    %p166 = scmp.eq.s32.totalorder %s23, 1
    %p167 = por %p165, %p166
    %p168 = scmp.ne.s32.totalorder %s159, %s160
    %p169 = scmp.eq.s32.totalorder %s23, 0
    %p170 = por %p168, %p169
    %p171 = scmp.ne.s32.totalorder %s159, %s160
    %p172 = scmp.eq.s32.totalorder %s24, 1
    %p173 = por %p171, %p172
    %p175 = scmp.ne.s32.totalorder %s160, %s174
    %p176 = scmp.eq.s32.totalorder %s24, 0
    %p177 = por %p175, %p176
    %s179 = sadd.s32 %s178, 1
    %p182 = scmp.eq.s32.totalorder %s18, 1
    %p183 = scmp.ne.s32.totalorder %s178, %s180
    %p184 = scmp.eq.s32.totalorder %s18, 0
    %p185 = por %p183, %p184
    %p186 = scmp.ne.s32.totalorder %s178, %s180
    %p187 = scmp.eq.s32.totalorder %s23, 1
    %p188 = por %p186, %p187
    %p189 = scmp.ne.s32.totalorder %s180, %s181
    %p190 = scmp.eq.s32.totalorder %s23, 0
    %p191 = por %p189, %p190
    %p192 = scmp.ne.s32.totalorder %s180, %s181
    %p193 = scmp.eq.s32.totalorder %s24, 1
    %p194 = por %p192, %p193
    %p196 = scmp.ne.s32.totalorder %s181, %s195
    %p197 = scmp.eq.s32.totalorder %s24, 0
    %p198 = por %p196, %p197
    %s200 = sadd.s32 %s199, 1
    %p203 = scmp.eq.s32.totalorder %s18, 1
    %p204 = scmp.ne.s32.totalorder %s199, %s201
    %p205 = scmp.eq.s32.totalorder %s18, 0
    %p206 = por %p204, %p205
    %p207 = scmp.ne.s32.totalorder %s199, %s201
    %p208 = scmp.eq.s32.totalorder %s23, 1
    %p209 = por %p207, %p208
    %p210 = scmp.ne.s32.totalorder %s201, %s202
    %p211 = scmp.eq.s32.totalorder %s23, 0
    %p212 = por %p210, %p211
    %p213 = scmp.ne.s32.totalorder %s201, %s202
    %p214 = scmp.eq.s32.totalorder %s24, 1
    %p215 = por %p213, %p214
    %p217 = scmp.ne.s32.totalorder %s202, %s216
    %p218 = scmp.eq.s32.totalorder %s24, 0
    %p219 = por %p217, %p218
    %s221 = sadd.s32 %s220, 1
    %p224 = scmp.eq.s32.totalorder %s18, 1
    %p225 = scmp.ne.s32.totalorder %s220, %s222
    %p226 = scmp.eq.s32.totalorder %s18, 0
    %p227 = por %p225, %p226
    %p228 = scmp.ne.s32.totalorder %s220, %s222
    %p229 = scmp.eq.s32.totalorder %s23, 1
    %p230 = por %p228, %p229
    %p231 = scmp.ne.s32.totalorder %s222, %s223
    %p232 = scmp.eq.s32.totalorder %s23, 0
    %p233 = por %p231, %p232
    %p234 = scmp.ne.s32.totalorder %s222, %s223
    %p235 = scmp.eq.s32.totalorder %s24, 1
    %p236 = por %p234, %p235
    %p238 = scmp.ne.s32.totalorder %s223, %s237
    %p239 = scmp.eq.s32.totalorder %s24, 0
    %p240 = por %p238, %p239
    %s242 = sadd.s32 %s241, 1
    %p245 = scmp.eq.s32.totalorder %s18, 1
    %p246 = scmp.ne.s32.totalorder %s241, %s243
    %p247 = scmp.eq.s32.totalorder %s18, 0
    %p248 = por %p246, %p247
    %p249 = scmp.ne.s32.totalorder %s241, %s243
    %p250 = scmp.eq.s32.totalorder %s23, 1
    %p251 = por %p249, %p250
    %p252 = scmp.ne.s32.totalorder %s243, %s244
    %p253 = scmp.eq.s32.totalorder %s23, 0
    %p254 = por %p252, %p253
    %p255 = scmp.ne.s32.totalorder %s243, %s244
    %p256 = scmp.eq.s32.totalorder %s24, 1
    %p257 = por %p255, %p256
    %p259 = scmp.ne.s32.totalorder %s244, %s258
    %p260 = scmp.eq.s32.totalorder %s24, 0
    %p261 = por %p259, %p260
    %s262 = ssub.s32 %s25, %s37
    %s263 = ssub.s32 %s26, %s33
    %s264 = sor.u32 %s262, %s263
    %p265 = scmp.eq.s32.totalorder %s264, 0
    %s267 = sadd.s32 %s266, 1
    %s268 = scalar_select %p265, %s266, %s267
    %p271 = pneg %p265
    %p272 = scmp.eq.s32.totalorder %s18, 1
    %p273 = por %p271, %p272
    %p274 = scmp.ne.s32.totalorder %s266, %s269
    %p275 = scmp.eq.s32.totalorder %s18, 0
    %p276 = por %p274, %p275
    %p277 = scmp.ne.s32.totalorder %s266, %s269
    %p278 = scmp.eq.s32.totalorder %s23, 1
    %p279 = por %p277, %p278
    %p280 = scmp.ne.s32.totalorder %s269, %s270
    %p281 = scmp.eq.s32.totalorder %s23, 0
    %p282 = por %p280, %p281
    %p283 = scmp.ne.s32.totalorder %s269, %s270
    %p284 = scmp.eq.s32.totalorder %s24, 1
    %p285 = por %p283, %p284
    %p287 = scmp.ne.s32.totalorder %s270, %s286
    %p288 = scmp.eq.s32.totalorder %s24, 0
    %p289 = por %p287, %p288
    %p290 = scmp.le.s32.totalorder 1, %s18
    %p291 = scmp.lt.s32.totalorder %s18, 3
    %p292 = pnand %p290, %p291
    %p293 = pneg %p292
    // Predicated region
    $region9: #{searchnet_forward.1} parent=5 // pred_check
      _
    $region10: #{searchnet_forward.1} parent=5 // pred_check_branch
      %295 = sbr.rel (%p292) target = $region12
    $region11: #{searchnet_forward.1} parent=5 // pred_region
      %s296 = ssub.s32 %s18, 1
      // Predicated region
      $region13: #{searchnet_forward.1} parent=11 // pred_check
        %p297 = pneg %p107
      $region14: #{searchnet_forward.1} parent=11 // pred_check_branch
        %299 = sbr.rel (%p297) target = $region16
      $region15: #{searchnet_forward.1} parent=11 // pred_region
        _
      $region16: #{searchnet_forward.1} parent=11 // pred_fallthru
        _
      // Predicated region
      $region17: #{searchnet_forward.1} parent=11 // pred_check
        %p300 = pneg %p128
      $region18: #{searchnet_forward.1} parent=11 // pred_check_branch
        %302 = sbr.rel (%p300) target = $region20
      $region19: #{searchnet_forward.1} parent=11 // pred_region
        _
      $region20: #{searchnet_forward.1} parent=11 // pred_fallthru
        _
      // Predicated region
      $region21: #{searchnet_forward.1} parent=11 // pred_check
        %p303 = pneg %p149
      $region22: #{searchnet_forward.1} parent=11 // pred_check_branch
        %305 = sbr.rel (%p303) target = $region24
      $region23: #{searchnet_forward.1} parent=11 // pred_region
        _
      $region24: #{searchnet_forward.1} parent=11 // pred_fallthru
        _
      // Predicated region
      $region25: #{searchnet_forward.1} parent=11 // pred_check
        %p306 = pneg %p170
      $region26: #{searchnet_forward.1} parent=11 // pred_check_branch
        %308 = sbr.rel (%p306) target = $region28
      $region27: #{searchnet_forward.1} parent=11 // pred_region
        _
      $region28: #{searchnet_forward.1} parent=11 // pred_fallthru
        _
      // Predicated region
      $region29: #{searchnet_forward.1} parent=11 // pred_check
        %p309 = pneg %p191
      $region30: #{searchnet_forward.1} parent=11 // pred_check_branch
        %311 = sbr.rel (%p309) target = $region32
      $region31: #{searchnet_forward.1} parent=11 // pred_region
        _
      $region32: #{searchnet_forward.1} parent=11 // pred_fallthru
        _
      // Predicated region
      $region33: #{searchnet_forward.1} parent=11 // pred_check
        %p312 = pneg %p212
      $region34: #{searchnet_forward.1} parent=11 // pred_check_branch
        %314 = sbr.rel (%p312) target = $region36
      $region35: #{searchnet_forward.1} parent=11 // pred_region
        _
      $region36: #{searchnet_forward.1} parent=11 // pred_fallthru
        _
      // Predicated region
      $region37: #{searchnet_forward.1} parent=11 // pred_check
        %p315 = pneg %p233
      $region38: #{searchnet_forward.1} parent=11 // pred_check_branch
        %317 = sbr.rel (%p315) target = $region40
      $region39: #{searchnet_forward.1} parent=11 // pred_region
        _
      $region40: #{searchnet_forward.1} parent=11 // pred_fallthru
        _
      // Predicated region
      $region41: #{searchnet_forward.1} parent=11 // pred_check
        %p318 = pneg %p254
      $region42: #{searchnet_forward.1} parent=11 // pred_check_branch
        %320 = sbr.rel (%p318) target = $region44
      $region43: #{searchnet_forward.1} parent=11 // pred_region
        _
      $region44: #{searchnet_forward.1} parent=11 // pred_fallthru
        _
    $region12: #{searchnet_forward.1} parent=5 // pred_fallthru
      _
    %p321 = scmp.lt.s32.totalorder %s18, 2
    // Predicated region
    $region45: #{searchnet_forward.1} parent=5 // pred_check
      %p322 = pneg %p321
    $region46: #{searchnet_forward.1} parent=5 // pred_check_branch
      %324 = sbr.rel (%p322) target = $region48
    $region47: #{searchnet_forward.1} parent=5 // pred_region
      // Predicated region
      $region49: #{searchnet_forward.1} parent=47 // pred_check
        %p325 = pneg %p52
      $region50: #{searchnet_forward.1} parent=47 // pred_check_branch
        %327 = sbr.rel (%p325) target = $region52
      $region51: #{searchnet_forward.1} parent=47 // pred_region
        %s328 = smul.u32 2, %s26
        %p329 = scmp.lt.s32.totalorder %s25, 1
        %s330 = scalar_select %p329, %s25, 1
        %p331 = scmp.lt.s32.totalorder %s328, 1
        %s332 = scalar_select %p331, %s328, 1
        %s333 = smul.addr %s330, 26
        %s334 = sadd.s32 %s332, %s333
        %s335 = smul.addr %s334, 8
        %s336 = scalar_lea.vmem %s0, %s335
        %s337 = smul.u32 2, %s26
      $region52: #{searchnet_forward.1} parent=47 // pred_fallthru
        _
      // Predicated region
      $region53: #{searchnet_forward.1} parent=47 // pred_check
        %p338 = pneg %p80
      $region54: #{searchnet_forward.1} parent=47 // pred_check_branch
        %340 = sbr.rel (%p338) target = $region56
      $region55: #{searchnet_forward.1} parent=47 // pred_region
        %s341 = smul.u32 2, %s26
        %p342 = scmp.lt.s32.totalorder %s25, 1
        %s343 = scalar_select %p342, %s25, 1
        %p344 = scmp.lt.s32.totalorder %s341, 1
        %s345 = scalar_select %p344, %s341, 1
        %s346 = smul.addr %s343, 26
        %s347 = sadd.s32 %s345, %s346
        %s348 = smul.addr %s347, 8
        %s349 = scalar_lea.vmem %s1, %s348
        %s350 = smul.u32 2, %s26
      $region56: #{searchnet_forward.1} parent=47 // pred_fallthru
        _
    $region48: #{searchnet_forward.1} parent=5 // pred_fallthru
      _
    %p351 = scmp.le.s32.totalorder 1, %s18
    %p352 = scmp.lt.s32.totalorder %s18, 3
    %p353 = pnand %p351, %p352
    %p354 = pneg %p353
    // Predicated region
    $region57: #{searchnet_forward.1} parent=5 // pred_check
      _
    $region58: #{searchnet_forward.1} parent=5 // pred_check_branch
      %356 = sbr.rel (%p353) target = $region60
    $region59: #{searchnet_forward.1} parent=5 // pred_region
      %s357 = ssub.s32 %s18, 1
      %s358 = smul.u32 2, %s28
      %p359 = scmp.lt.s32.totalorder %s27, 1
      %s360 = scalar_select %p359, %s27, 1
      %p361 = scmp.lt.s32.totalorder %s358, 1
      %s362 = scalar_select %p361, %s358, 1
      %s363 = smul.addr %s360, 26
      %s364 = sadd.s32 %s362, %s363
      %s365 = smul.addr %s364, 8
      %s366 = scalar_lea.vmem %s0, %s365
      %p367 = pneg %p58
      %p368 = pneg %p55
      %s369 = smul.u32 2, %s28
      %p370 = scmp.lt.s32.totalorder %s27, 1
      %s371 = scalar_select %p370, %s27, 1
      %p372 = scmp.lt.s32.totalorder %s369, 1
      %s373 = scalar_select %p372, %s369, 1
      %s374 = smul.addr %s371, 26
      %s375 = sadd.s32 %s373, %s374
      %s376 = smul.addr %s375, 8
      %s377 = scalar_lea.vmem %s1, %s376
      %p378 = pneg %p86
      %p379 = pneg %p83
      %p380 = pneg %p107
      %p381 = pneg %p104
      %p382 = pneg %p128
      %p383 = pneg %p125
      %p384 = pneg %p149
      %p385 = pneg %p146
      %p386 = pneg %p170
      %p387 = pneg %p167
      %p388 = pneg %p191
      %p389 = pneg %p188
      %p390 = pneg %p212
      %p391 = pneg %p209
      %p392 = pneg %p233
      %p393 = pneg %p230
      %p394 = pneg %p254
      %p395 = pneg %p251
      %p396 = pneg %p282
      %p397 = pneg %p279
      %s398 = smul.u32 2, %s28
      %p399 = scmp.lt.s32.totalorder %s27, 1
      %s400 = scalar_select %p399, %s27, 1
      %p401 = scmp.lt.s32.totalorder %s398, 1
      %s402 = scalar_select %p401, %s398, 1
      %s403 = smul.addr %s400, 2
      %s404 = sadd.s32 %s402, %s403
      %s405 = scalar_lea.vmem %s10, %s404
      %s406 = smul.u32 2, %s28
      %p407 = scmp.lt.s32.totalorder %s27, 1
      %s408 = scalar_select %p407, %s27, 1
      %p409 = scmp.lt.s32.totalorder %s406, 1
      %s410 = scalar_select %p409, %s406, 1
      %s411 = smul.addr %s408, 26
      %s412 = sadd.s32 %s410, %s411
      %s413 = smul.addr %s412, 8
      %s414 = scalar_lea.vmem %s0, %s413
      %s415 = smul.u32 2, %s28
      %s416 = smul.u32 2, %s28
      %p417 = scmp.lt.s32.totalorder %s27, 1
      %s418 = scalar_select %p417, %s27, 1
      %p419 = scmp.lt.s32.totalorder %s416, 1
      %s420 = scalar_select %p419, %s416, 1
      %s421 = smul.addr %s418, 26
      %s422 = sadd.s32 %s420, %s421
      %s423 = smul.addr %s422, 8
      %s424 = scalar_lea.vmem %s1, %s423
      %s425 = smul.u32 2, %s28
      %s426 = smul.u32 2, %s28
      %p427 = scmp.lt.s32.totalorder %s27, 1
      %s428 = scalar_select %p427, %s27, 1
      %p429 = scmp.lt.s32.totalorder %s426, 1
      %s430 = scalar_select %p429, %s426, 1
      %s431 = smul.addr %s428, 2
      %s432 = sadd.s32 %s430, %s431
      %s433 = scalar_lea.vmem %s10, %s432
      %s434 = smul.u32 2, %s28
      %v436 = vld [vmem:[%s414] sm:$0xff]
      %v437 = vld [vmem:[%s414 + $0x8] sm:$0xff]
      %v438 = vld [vmem:[%s414 + $0x10] sm:$0xff]
      %v439 = vld [vmem:[%s414 + $0x18] sm:$0xff]
      %v440 = vld [vmem:[%s414 + $0x20] sm:$0xff]
      %v441 = vld [vmem:[%s414 + $0x28] sm:$0xff]
      %v442 = vld [vmem:[%s414 + $0x30] sm:$0xff]
      %v443 = vld [vmem:[%s414 + $0x38] sm:$0xff]
      %v444 = vld [vmem:[%s414 + $0x40] sm:$0xff]
      %v445 = vld [vmem:[%s414 + $0x48] sm:$0xff]
      %v446 = vld [vmem:[%s414 + $0x50] sm:$0xff]
      %v447 = vld [vmem:[%s414 + $0x58] sm:$0xff]
      %v448 = vld [vmem:[%s414 + $0x60] sm:$0xff]
      %v449 = vld [vmem:[%s414 + $0x68] sm:$0xff]
      %v450 = vld [vmem:[%s414 + $0x70] sm:$0xff]
      %v451 = vld [vmem:[%s414 + $0x78] sm:$0xff]
      %v452 = vld [vmem:[%s414 + $0x80] sm:$0xff]
      %v453 = vld [vmem:[%s414 + $0x88] sm:$0xff]
      %v454 = vld [vmem:[%s414 + $0x90] sm:$0xff]
      %v455 = vld [vmem:[%s414 + $0x98] sm:$0xff]
      %v456 = vld [vmem:[%s414 + $0xa0] sm:$0xff]
      %v457 = vld [vmem:[%s414 + $0xa8] sm:$0xff]
      %v458 = vld [vmem:[%s414 + $0xb0] sm:$0xff]
      %v459 = vld [vmem:[%s414 + $0xb8] sm:$0xff]
      %v460 = vld [vmem:[%s414 + $0xc0] sm:$0xf]
      %v461 = vld [vmem:[%s414 + $0xc8] sm:$0xf]
      %v462 = vpack.c.bf16 %v438, %v436
      %v463 = vpack.c.bf16 %v439, %v437
      %v464 = vpack.c.bf16 %v442, %v440
      %v465 = vpack.c.bf16 %v443, %v441
      %v466 = vpack.c.bf16 %v446, %v444
      %v467 = vpack.c.bf16 %v447, %v445
      %v468 = vpack.c.bf16 %v450, %v448
      %v469 = vpack.c.bf16 %v451, %v449
      %v470 = vpack.c.bf16 %v454, %v452
      %v471 = vpack.c.bf16 %v455, %v453
      %v472 = vpack.c.bf16 %v458, %v456
      %v473 = vpack.c.bf16 %v459, %v457
      %v474 = vpack.c.bf16 %v460, %v460
      %v475 = vpack.c.bf16 %v461, %v461
      %v476 = vld [vmem:[%s424] sm:$0xff]
      %v477 = vld [vmem:[%s424 + $0x8] sm:$0xff]
      %v478 = vld [vmem:[%s424 + $0x10] sm:$0xff]
      %v479 = vld [vmem:[%s424 + $0x18] sm:$0xff]
      %v480 = vld [vmem:[%s424 + $0x20] sm:$0xff]
      %v481 = vld [vmem:[%s424 + $0x28] sm:$0xff]
      %v482 = vld [vmem:[%s424 + $0x30] sm:$0xff]
      %v483 = vld [vmem:[%s424 + $0x38] sm:$0xff]
      %v484 = vld [vmem:[%s424 + $0x40] sm:$0xff]
      %v485 = vld [vmem:[%s424 + $0x48] sm:$0xff]
      %v486 = vld [vmem:[%s424 + $0x50] sm:$0xff]
      %v487 = vld [vmem:[%s424 + $0x58] sm:$0xff]
      %v488 = vld [vmem:[%s424 + $0x60] sm:$0xff]
      %v489 = vld [vmem:[%s424 + $0x68] sm:$0xff]
      %v490 = vld [vmem:[%s424 + $0x70] sm:$0xff]
      %v491 = vld [vmem:[%s424 + $0x78] sm:$0xff]
      %v492 = vld [vmem:[%s424 + $0x80] sm:$0xff]
      %v493 = vld [vmem:[%s424 + $0x88] sm:$0xff]
      %v494 = vld [vmem:[%s424 + $0x90] sm:$0xff]
      %v495 = vld [vmem:[%s424 + $0x98] sm:$0xff]
      %v496 = vld [vmem:[%s424 + $0xa0] sm:$0xff]
      %v497 = vld [vmem:[%s424 + $0xa8] sm:$0xff]
      %v498 = vld [vmem:[%s424 + $0xb0] sm:$0xff]
      %v499 = vld [vmem:[%s424 + $0xb8] sm:$0xff]
      %v500 = vld [vmem:[%s424 + $0xc0] sm:$0xf]
      %v501 = vld [vmem:[%s424 + $0xc8] sm:$0xf]
      %v502 = vpack.c.bf16 %v478, %v476
      %v503 = vpack.c.bf16 %v479, %v477
      %v504 = vpack.c.bf16 %v482, %v480
      %v505 = vpack.c.bf16 %v483, %v481
      %v506 = vpack.c.bf16 %v486, %v484
      %v507 = vpack.c.bf16 %v487, %v485
      %v508 = vpack.c.bf16 %v490, %v488
      %v509 = vpack.c.bf16 %v491, %v489
      %v510 = vpack.c.bf16 %v494, %v492
      %v511 = vpack.c.bf16 %v495, %v493
      %v512 = vpack.c.bf16 %v498, %v496
      %v513 = vpack.c.bf16 %v499, %v497
      %v514 = vpack.c.bf16 %v500, %v500
      %v515 = vpack.c.bf16 %v501, %v501
      %v516 = vld [vmem:[%s2] sm:$0xf]
      %v517 = vld [vmem:[%s2 + $0x4] sm:$0xf]
      %v518 = vld [vmem:[%s2 + $0x8] sm:$0xf]
      %v519 = vld [vmem:[%s2 + $0xc] sm:$0xf]
      %v520 = vld [vmem:[%s2 + $0x10] sm:$0xf]
      %v521 = vld [vmem:[%s2 + $0x14] sm:$0xf]
      %v522 = vld [vmem:[%s2 + $0x18] sm:$0xf]
      %v523 = vld [vmem:[%s2 + $0x1c] sm:$0xf]
      %v524 = vld [vmem:[%s2 + $0x20] sm:$0xf]
      %v525 = vld [vmem:[%s2 + $0x24] sm:$0xf]
      %v526 = vld [vmem:[%s2 + $0x28] sm:$0xf]
      %v527 = vld [vmem:[%s2 + $0x2c] sm:$0xf]
      %v528 = vld [vmem:[%s2 + $0x30] sm:$0x3]
      %v529 = vld [vmem:[%s3] sm:$0xff]
      %v530 = vld [vmem:[%s3 + $0x8] sm:$0xff]
      %v531 = vld [vmem:[%s3 + $0x10] sm:$0xff]
      %v532 = vld [vmem:[%s3 + $0x18] sm:$0xff]
      %v533 = vld [vmem:[%s3 + $0x20] sm:$0xff]
      %v534 = vld [vmem:[%s3 + $0x28] sm:$0xff]
      %v535 = vld [vmem:[%s3 + $0x30] sm:$0xff]
      %v536 = vld [vmem:[%s3 + $0x38] sm:$0xff]
      %v537 = vld [vmem:[%s3 + $0x40] sm:$0xff]
      %v538 = vld [vmem:[%s3 + $0x48] sm:$0xff]
      %v539 = vld [vmem:[%s3 + $0x50] sm:$0xff]
      %v540 = vld [vmem:[%s3 + $0x58] sm:$0xff]
      %v541 = vld [vmem:[%s3 + $0x60] sm:$0xf]
      %543 = vset.pattern.permute.xlu0 0
      %544 = vperm.xlu0 %543, %v529
      %v545 = vpop.permute.xlu0 %544
      %548 = vset.pattern.permute.xlu0 0
      %549 = vperm.xlu0 %548, %v530
      %v550 = vpop.permute.xlu0 %549
      %553 = vset.pattern.permute.xlu0 0
      %554 = vperm.xlu0 %553, %v531
      %v555 = vpop.permute.xlu0 %554
      %558 = vset.pattern.permute.xlu0 0
      %559 = vperm.xlu0 %558, %v532
      %v560 = vpop.permute.xlu0 %559
      %563 = vset.pattern.permute.xlu0 0
      %564 = vperm.xlu0 %563, %v533
      %v565 = vpop.permute.xlu0 %564
      %568 = vset.pattern.permute.xlu0 0
      %569 = vperm.xlu0 %568, %v534
      %v570 = vpop.permute.xlu0 %569
      %573 = vset.pattern.permute.xlu0 0
      %574 = vperm.xlu0 %573, %v535
      %v575 = vpop.permute.xlu0 %574
      %578 = vset.pattern.permute.xlu0 0
      %579 = vperm.xlu0 %578, %v536
      %v580 = vpop.permute.xlu0 %579
      %583 = vset.pattern.permute.xlu0 0
      %584 = vperm.xlu0 %583, %v537
      %v585 = vpop.permute.xlu0 %584
      %588 = vset.pattern.permute.xlu0 0
      %589 = vperm.xlu0 %588, %v538
      %v590 = vpop.permute.xlu0 %589
      %593 = vset.pattern.permute.xlu0 0
      %594 = vperm.xlu0 %593, %v539
      %v595 = vpop.permute.xlu0 %594
      %598 = vset.pattern.permute.xlu0 0
      %599 = vperm.xlu0 %598, %v540
      %v600 = vpop.permute.xlu0 %599
      %603 = vset.pattern.permute.xlu0 0
      %604 = vperm.xlu0 %603, %v541
      %v605 = vpop.permute.xlu0 %604
      %v620 = vunpack.c.l.b16 %v516
      %v621 = vunpack.c.l.b16 %v517
      %v622 = vunpack.c.l.b16 %v518
      %v623 = vunpack.c.l.b16 %v519
      %v624 = vunpack.c.l.b16 %v520
      %v625 = vunpack.c.l.b16 %v521
      %v626 = vunpack.c.l.b16 %v522
      %v627 = vunpack.c.l.b16 %v523
      %v628 = vunpack.c.l.b16 %v524
      %v629 = vunpack.c.l.b16 %v525
      %v630 = vunpack.c.l.b16 %v526
      %v631 = vunpack.c.l.b16 %v527
      %v632 = vunpack.c.l.b16 %v528
      %v633 = vpack.c.b16 %v621, %v620
      %v634 = vpack.c.b16 %v623, %v622
      %v635 = vpack.c.b16 %v625, %v624
      %v636 = vpack.c.b16 %v627, %v626
      %v637 = vpack.c.b16 %v629, %v628
      %v638 = vpack.c.b16 %v631, %v630
      %v639 = vpack.c.b16 %v632, %v632
      %vm640 = vcmask 818176
      %v642 = vsel %vm640, %v633, 0
      %v645 = vsel %vm640, %v634, 0
      %v648 = vsel %vm640, %v635, 0
      %v651 = vsel %vm640, %v636, 0
      %v654 = vsel %vm640, %v637, 0
      %v657 = vsel %vm640, %v638, 0
      %v660 = vsel %vm640, %v639, 0
      %vm662 = vcmask 1041408
      %v664 = vsel %vm662, %v514, 0
      %v667 = vsel %vm662, %v515, 0
      %669 = vmatprep.subr.bf16.mxu0 0
      %670 = vmatpush1.bf16.msra.mxu0 0
      %671 = vmatprep.subr.bf16.mxu0 %v667
      %672 = vmatpush1.bf16.msra.mxu0 %v664
      %673 = vmatprep.subr.bf16.mxu0 %v513
      %674 = vmatpush1.bf16.msra.mxu0 %v512
      %675 = vmatprep.subr.bf16.mxu0 %v511
      %676 = vmatpush1.bf16.msra.mxu0 %v510
      %677 = vmatprep.subr.bf16.mxu0 %v509
      %678 = vmatpush1.bf16.msra.mxu0 %v508
      %679 = vmatprep.subr.bf16.mxu0 %v507
      %680 = vmatpush1.bf16.msra.mxu0 %v506
      %681 = vmatprep.subr.bf16.mxu0 %v505
      %682 = vmatpush1.bf16.msra.mxu0 %v504
      %683 = vmatprep.subr.bf16.mxu0 %v503
      %684 = vmatpush1.bf16.msra.mxu0 %v502
      %685 = vmatprep.subr.bf16.mxu0 0
      %686 = vmatpush2.bf16.msra.mxu0 0
      %687 = vmatprep.subr.bf16.mxu0 0
      %688 = vmatpush2.bf16.msra.mxu0 0
      %689 = vmatprep.subr.bf16.mxu0 0
      %690 = vmatpush2.bf16.msra.mxu0 0
      %691 = vmatprep.subr.bf16.mxu0 0
      %692 = vmatpush2.bf16.msra.mxu0 0
      %693 = vmatprep.subr.bf16.mxu0 0
      %694 = vmatpush2.bf16.msra.mxu0 0
      %695 = vmatprep.subr.bf16.mxu0 0
      %696 = vmatpush2.bf16.msra.mxu0 0
      %697 = vmatprep.subr.bf16.mxu0 0
      %698 = vmatpush2.bf16.msra.mxu0 0
      %699 = vmatprep.subr.bf16.mxu0 0
      %700 = vmatpush2.bf16.msra.mxu0 0
      %701 = vmatprep.mubr.bf16.mxu0 0
      %702 = vmatmul.mubr.bf16.gmra.mxu0 %v642
      %v703 = vpop.f32.mrf.mxu0
      %v704 = vadd.f32 %v545, %v703
      %v705 = vpop.f32.mrf.mxu0
      %v706 = vadd.f32 %v545, %v705
      %v707 = vpop.f32.mrf.mxu0
      %v708 = vadd.f32 %v550, %v707
      %v709 = vpop.f32.mrf.mxu0
      %v710 = vadd.f32 %v550, %v709
      %711 = vmatprep.mubr.bf16.mxu0 0
      %712 = vmatmul.mubr.bf16.gmra.mxu0 %v645
      %v713 = vpop.f32.mrf.mxu0
      %v714 = vadd.f32 %v555, %v713
      %v715 = vpop.f32.mrf.mxu0
      %v716 = vadd.f32 %v555, %v715
      %v717 = vpop.f32.mrf.mxu0
      %v718 = vadd.f32 %v560, %v717
      %v719 = vpop.f32.mrf.mxu0
      %v720 = vadd.f32 %v560, %v719
      %721 = vmatprep.mubr.bf16.mxu0 0
      %722 = vmatmul.mubr.bf16.gmra.mxu0 %v648
      %v723 = vpop.f32.mrf.mxu0
      %v724 = vadd.f32 %v565, %v723
      %v725 = vpop.f32.mrf.mxu0
      %v726 = vadd.f32 %v565, %v725
      %v727 = vpop.f32.mrf.mxu0
      %v728 = vadd.f32 %v570, %v727
      %v729 = vpop.f32.mrf.mxu0
      %v730 = vadd.f32 %v570, %v729
      %731 = vmatprep.mubr.bf16.mxu0 0
      %732 = vmatmul.mubr.bf16.gmra.mxu0 %v651
      %v733 = vpop.f32.mrf.mxu0
      %v734 = vadd.f32 %v575, %v733
      %v735 = vpop.f32.mrf.mxu0
      %v736 = vadd.f32 %v575, %v735
      %v737 = vpop.f32.mrf.mxu0
      %v738 = vadd.f32 %v580, %v737
      %v739 = vpop.f32.mrf.mxu0
      %v740 = vadd.f32 %v580, %v739
      %741 = vmatprep.mubr.bf16.mxu0 0
      %742 = vmatmul.mubr.bf16.gmra.mxu0 %v654
      %v743 = vpop.f32.mrf.mxu0
      %v744 = vadd.f32 %v585, %v743
      %v745 = vpop.f32.mrf.mxu0
      %v746 = vadd.f32 %v585, %v745
      %v747 = vpop.f32.mrf.mxu0
      %v748 = vadd.f32 %v590, %v747
      %v749 = vpop.f32.mrf.mxu0
      %v750 = vadd.f32 %v590, %v749
      %751 = vmatprep.mubr.bf16.mxu0 0
      %752 = vmatmul.mubr.bf16.gmra.mxu0 %v657
      %v753 = vpop.f32.mrf.mxu0
      %v754 = vadd.f32 %v595, %v753
      %v755 = vpop.f32.mrf.mxu0
      %v756 = vadd.f32 %v595, %v755
      %v757 = vpop.f32.mrf.mxu0
      %v758 = vadd.f32 %v600, %v757
      %v759 = vpop.f32.mrf.mxu0
      %v760 = vadd.f32 %v600, %v759
      %761 = vmatprep.mubr.bf16.mxu0 0
      %762 = vmatmul.mubr.bf16.gmra.mxu0 %v660
      %v763 = vpop.f32.mrf.mxu0
      %v764 = vadd.f32 %v605, %v763
      %v765 = vpop.f32.mrf.mxu0
      %v766 = vadd.f32 %v605, %v765
      %v767 = vpop.f32.mrf.mxu0
      %v768 = vpop.f32.mrf.mxu0
      %769 = vdwg.mxu0
      %v770 = vmax.f32 %v704, 0.0
      %v771 = vmax.f32 %v706, 0.0
      %v772 = vmax.f32 %v708, 0.0
      %v773 = vmax.f32 %v710, 0.0
      %v774 = vmax.f32 %v714, 0.0
      %v775 = vmax.f32 %v716, 0.0
      %v776 = vmax.f32 %v718, 0.0
      %v777 = vmax.f32 %v720, 0.0
      %v778 = vmax.f32 %v724, 0.0
      %v779 = vmax.f32 %v726, 0.0
      %v780 = vmax.f32 %v728, 0.0
      %v781 = vmax.f32 %v730, 0.0
      %v782 = vmax.f32 %v734, 0.0
      %v783 = vmax.f32 %v736, 0.0
      %v784 = vmax.f32 %v738, 0.0
      %v785 = vmax.f32 %v740, 0.0
      %v786 = vmax.f32 %v744, 0.0
      %v787 = vmax.f32 %v746, 0.0
      %v788 = vmax.f32 %v748, 0.0
      %v789 = vmax.f32 %v750, 0.0
      %v790 = vmax.f32 %v754, 0.0
      %v791 = vmax.f32 %v756, 0.0
      %v792 = vmax.f32 %v758, 0.0
      %v793 = vmax.f32 %v760, 0.0
      %v794 = vmax.f32 %v764, 0.0
      %v795 = vmax.f32 %v766, 0.0
      %v796 = vld [vmem:[%s4] sm:$0xf]
      %v797 = vld [vmem:[%s4 + $0x4] sm:$0xf]
      %v798 = vld [vmem:[%s4 + $0x8] sm:$0xf]
      %v799 = vld [vmem:[%s4 + $0xc] sm:$0xf]
      %v800 = vld [vmem:[%s4 + $0x10] sm:$0xf]
      %v801 = vld [vmem:[%s4 + $0x14] sm:$0xf]
      %v802 = vld [vmem:[%s4 + $0x18] sm:$0x1]
      %v803 = vpack.c.bf16 %v772, %v770
      %v804 = vpack.c.bf16 %v773, %v771
      %v805 = vpack.c.bf16 %v776, %v774
      %v806 = vpack.c.bf16 %v777, %v775
      %v807 = vpack.c.bf16 %v780, %v778
      %v808 = vpack.c.bf16 %v781, %v779
      %v809 = vpack.c.bf16 %v784, %v782
      %v810 = vpack.c.bf16 %v785, %v783
      %v811 = vpack.c.bf16 %v788, %v786
      %v812 = vpack.c.bf16 %v789, %v787
      %v813 = vpack.c.bf16 %v792, %v790
      %v814 = vpack.c.bf16 %v793, %v791
      %v815 = vpack.c.bf16 %v794, %v794
      %v816 = vpack.c.bf16 %v795, %v795
      %v817 = vld [vmem:[%s5] sm:$0xff]
      %v818 = vld [vmem:[%s5 + $0x8] sm:$0xff]
      %v819 = vld [vmem:[%s5 + $0x10] sm:$0xff]
      %v820 = vld [vmem:[%s5 + $0x18] sm:$0xff]
      %v821 = vld [vmem:[%s5 + $0x20] sm:$0xff]
      %v822 = vld [vmem:[%s5 + $0x28] sm:$0xff]
      %v823 = vld [vmem:[%s5 + $0x30] sm:$0x3]
      %825 = vset.pattern.permute.xlu0 0
      %826 = vperm.xlu0 %825, %v817
      %v827 = vpop.permute.xlu0 %826
      %830 = vset.pattern.permute.xlu0 0
      %831 = vperm.xlu0 %830, %v818
      %v832 = vpop.permute.xlu0 %831
      %835 = vset.pattern.permute.xlu0 0
      %836 = vperm.xlu0 %835, %v819
      %v837 = vpop.permute.xlu0 %836
      %840 = vset.pattern.permute.xlu0 0
      %841 = vperm.xlu0 %840, %v820
      %v842 = vpop.permute.xlu0 %841
      %845 = vset.pattern.permute.xlu0 0
      %846 = vperm.xlu0 %845, %v821
      %v847 = vpop.permute.xlu0 %846
      %850 = vset.pattern.permute.xlu0 0
      %851 = vperm.xlu0 %850, %v822
      %v852 = vpop.permute.xlu0 %851
      %855 = vset.pattern.permute.xlu0 0
      %856 = vperm.xlu0 %855, %v823
      %v857 = vpop.permute.xlu0 %856
      %v866 = vunpack.c.l.b16 %v796
      %v867 = vunpack.c.l.b16 %v797
      %v868 = vunpack.c.l.b16 %v798
      %v869 = vunpack.c.l.b16 %v799
      %v870 = vunpack.c.l.b16 %v800
      %v871 = vunpack.c.l.b16 %v801
      %v872 = vunpack.c.l.b16 %v802
      %v873 = vpack.c.b16 %v867, %v866
      %v874 = vpack.c.b16 %v869, %v868
      %v875 = vpack.c.b16 %v871, %v870
      %v876 = vpack.c.b16 %v872, %v872
      %v878 = vsel %vm640, %v873, 0
      %v881 = vsel %vm640, %v874, 0
      %v884 = vsel %vm640, %v875, 0
      %v887 = vsel %vm640, %v876, 0
      %v890 = vsel %vm662, %v815, 0
      %v893 = vsel %vm662, %v816, 0
      %895 = vmatprep.subr.bf16.mxu0 0
      %896 = vmatpush1.bf16.msra.mxu0 0
      %897 = vmatprep.subr.bf16.mxu0 %v893
      %898 = vmatpush1.bf16.msra.mxu0 %v890
      %899 = vmatprep.subr.bf16.mxu0 %v814
      %900 = vmatpush1.bf16.msra.mxu0 %v813
      %901 = vmatprep.subr.bf16.mxu0 %v812
      %902 = vmatpush1.bf16.msra.mxu0 %v811
      %903 = vmatprep.subr.bf16.mxu0 %v810
      %904 = vmatpush1.bf16.msra.mxu0 %v809
      %905 = vmatprep.subr.bf16.mxu0 %v808
      %906 = vmatpush1.bf16.msra.mxu0 %v807
      %907 = vmatprep.subr.bf16.mxu0 %v806
      %908 = vmatpush1.bf16.msra.mxu0 %v805
      %909 = vmatprep.subr.bf16.mxu0 %v804
      %910 = vmatpush1.bf16.msra.mxu0 %v803
      %911 = vmatprep.subr.bf16.mxu0 0
      %912 = vmatpush2.bf16.msra.mxu0 0
      %913 = vmatprep.subr.bf16.mxu0 0
      %914 = vmatpush2.bf16.msra.mxu0 0
      %915 = vmatprep.subr.bf16.mxu0 0
      %916 = vmatpush2.bf16.msra.mxu0 0
      %917 = vmatprep.subr.bf16.mxu0 0
      %918 = vmatpush2.bf16.msra.mxu0 0
      %919 = vmatprep.subr.bf16.mxu0 0
      %920 = vmatpush2.bf16.msra.mxu0 0
      %921 = vmatprep.subr.bf16.mxu0 0
      %922 = vmatpush2.bf16.msra.mxu0 0
      %923 = vmatprep.subr.bf16.mxu0 0
      %924 = vmatpush2.bf16.msra.mxu0 0
      %925 = vmatprep.subr.bf16.mxu0 0
      %926 = vmatpush2.bf16.msra.mxu0 0
      %927 = vmatprep.mubr.bf16.mxu0 0
      %928 = vmatmul.mubr.bf16.gmra.mxu0 %v878
      %v929 = vpop.f32.mrf.mxu0
      %v930 = vadd.f32 %v827, %v929
      %v931 = vpop.f32.mrf.mxu0
      %v932 = vadd.f32 %v827, %v931
      %v933 = vpop.f32.mrf.mxu0
      %v934 = vadd.f32 %v832, %v933
      %v935 = vpop.f32.mrf.mxu0
      %v936 = vadd.f32 %v832, %v935
      %937 = vmatprep.mubr.bf16.mxu0 0
      %938 = vmatmul.mubr.bf16.gmra.mxu0 %v881
      %v939 = vpop.f32.mrf.mxu0
      %v940 = vadd.f32 %v837, %v939
      %v941 = vpop.f32.mrf.mxu0
      %v942 = vadd.f32 %v837, %v941
      %v943 = vpop.f32.mrf.mxu0
      %v944 = vadd.f32 %v842, %v943
      %v945 = vpop.f32.mrf.mxu0
      %v946 = vadd.f32 %v842, %v945
      %947 = vmatprep.mubr.bf16.mxu0 0
      %948 = vmatmul.mubr.bf16.gmra.mxu0 %v884
      %v949 = vpop.f32.mrf.mxu0
      %v950 = vadd.f32 %v847, %v949
      %v951 = vpop.f32.mrf.mxu0
      %v952 = vadd.f32 %v847, %v951
      %v953 = vpop.f32.mrf.mxu0
      %v954 = vadd.f32 %v852, %v953
      %v955 = vpop.f32.mrf.mxu0
      %v956 = vadd.f32 %v852, %v955
      %957 = vmatprep.mubr.bf16.mxu0 0
      %958 = vmatmul.mubr.bf16.gmra.mxu0 %v887
      %v959 = vpop.f32.mrf.mxu0
      %v960 = vadd.f32 %v857, %v959
      %v961 = vpop.f32.mrf.mxu0
      %v962 = vadd.f32 %v857, %v961
      %v963 = vpop.f32.mrf.mxu0
      %v964 = vpop.f32.mrf.mxu0
      %965 = vdwg.mxu0
      %v966 = vmax.f32 %v930, 0.0
      %v967 = vmax.f32 %v932, 0.0
      %v968 = vmax.f32 %v934, 0.0
      %v969 = vmax.f32 %v936, 0.0
      %v970 = vmax.f32 %v940, 0.0
      %v971 = vmax.f32 %v942, 0.0
      %v972 = vmax.f32 %v944, 0.0
      %v973 = vmax.f32 %v946, 0.0
      %v974 = vmax.f32 %v950, 0.0
      %v975 = vmax.f32 %v952, 0.0
      %v976 = vmax.f32 %v954, 0.0
      %v977 = vmax.f32 %v956, 0.0
      %v978 = vmax.f32 %v960, 0.0
      %v979 = vmax.f32 %v962, 0.0
      %v980 = vld [vmem:[%s6] sm:$0xf]
      %v981 = vld [vmem:[%s6 + $0x4] sm:$0xf]
      %v982 = vld [vmem:[%s6 + $0x8] sm:$0xf]
      %v983 = vld [vmem:[%s6 + $0xc] sm:$0xf]
      %v984 = vld [vmem:[%s6 + $0x10] sm:$0xf]
      %v985 = vld [vmem:[%s6 + $0x14] sm:$0xf]
      %v986 = vld [vmem:[%s6 + $0x18] sm:$0x1]
      %v987 = vld [vmem:[%s7] sm:$0xff]
      %v988 = vld [vmem:[%s7 + $0x8] sm:$0xff]
      %v989 = vld [vmem:[%s7 + $0x10] sm:$0xff]
      %v990 = vld [vmem:[%s7 + $0x18] sm:$0xff]
      %v991 = vld [vmem:[%s7 + $0x20] sm:$0xff]
      %v992 = vld [vmem:[%s7 + $0x28] sm:$0xff]
      %v993 = vld [vmem:[%s7 + $0x30] sm:$0x3]
      %995 = vset.pattern.permute.xlu0 0
      %996 = vperm.xlu0 %995, %v987
      %v997 = vpop.permute.xlu0 %996
      %1000 = vset.pattern.permute.xlu0 0
      %1001 = vperm.xlu0 %1000, %v988
      %v1002 = vpop.permute.xlu0 %1001
      %1005 = vset.pattern.permute.xlu0 0
      %1006 = vperm.xlu0 %1005, %v989
      %v1007 = vpop.permute.xlu0 %1006
      %1010 = vset.pattern.permute.xlu0 0
      %1011 = vperm.xlu0 %1010, %v990
      %v1012 = vpop.permute.xlu0 %1011
      %1015 = vset.pattern.permute.xlu0 0
      %1016 = vperm.xlu0 %1015, %v991
      %v1017 = vpop.permute.xlu0 %1016
      %1020 = vset.pattern.permute.xlu0 0
      %1021 = vperm.xlu0 %1020, %v992
      %v1022 = vpop.permute.xlu0 %1021
      %1025 = vset.pattern.permute.xlu0 0
      %1026 = vperm.xlu0 %1025, %v993
      %v1027 = vpop.permute.xlu0 %1026
      %v1036 = vunpack.c.l.b16 %v980
      %v1037 = vunpack.c.l.b16 %v981
      %v1038 = vunpack.c.l.b16 %v982
      %v1039 = vunpack.c.l.b16 %v983
      %v1040 = vunpack.c.l.b16 %v984
      %v1041 = vunpack.c.l.b16 %v985
      %v1042 = vunpack.c.l.b16 %v986
      %v1043 = vpack.c.b16 %v1037, %v1036
      %v1044 = vpack.c.b16 %v1039, %v1038
      %v1045 = vpack.c.b16 %v1041, %v1040
      %v1046 = vpack.c.b16 %v1042, %v1042
      %v1048 = vsel %vm640, %v1043, 0
      %v1051 = vsel %vm640, %v1044, 0
      %v1054 = vsel %vm640, %v1045, 0
      %v1057 = vsel %vm640, %v1046, 0
      %v1060 = vsel %vm662, %v474, 0
      %v1063 = vsel %vm662, %v475, 0
      %1065 = vmatprep.subr.bf16.mxu0 0
      %1066 = vmatpush1.bf16.msra.mxu0 0
      %1067 = vmatprep.subr.bf16.mxu0 %v1063
      %1068 = vmatpush1.bf16.msra.mxu0 %v1060
      %1069 = vmatprep.subr.bf16.mxu0 %v473
      %1070 = vmatpush1.bf16.msra.mxu0 %v472
      %1071 = vmatprep.subr.bf16.mxu0 %v471
      %1072 = vmatpush1.bf16.msra.mxu0 %v470
      %1073 = vmatprep.subr.bf16.mxu0 %v469
      %1074 = vmatpush1.bf16.msra.mxu0 %v468
      %1075 = vmatprep.subr.bf16.mxu0 %v467
      %1076 = vmatpush1.bf16.msra.mxu0 %v466
      %1077 = vmatprep.subr.bf16.mxu0 %v465
      %1078 = vmatpush1.bf16.msra.mxu0 %v464
      %1079 = vmatprep.subr.bf16.mxu0 %v463
      %1080 = vmatpush1.bf16.msra.mxu0 %v462
      %1081 = vmatprep.subr.bf16.mxu0 0
      %1082 = vmatpush2.bf16.msra.mxu0 0
      %1083 = vmatprep.subr.bf16.mxu0 0
      %1084 = vmatpush2.bf16.msra.mxu0 0
      %1085 = vmatprep.subr.bf16.mxu0 0
      %1086 = vmatpush2.bf16.msra.mxu0 0
      %1087 = vmatprep.subr.bf16.mxu0 0
      %1088 = vmatpush2.bf16.msra.mxu0 0
      %1089 = vmatprep.subr.bf16.mxu0 0
      %1090 = vmatpush2.bf16.msra.mxu0 0
      %1091 = vmatprep.subr.bf16.mxu0 0
      %1092 = vmatpush2.bf16.msra.mxu0 0
      %1093 = vmatprep.subr.bf16.mxu0 0
      %1094 = vmatpush2.bf16.msra.mxu0 0
      %1095 = vmatprep.subr.bf16.mxu0 0
      %1096 = vmatpush2.bf16.msra.mxu0 0
      %1097 = vmatprep.mubr.bf16.mxu0 0
      %1098 = vmatmul.mubr.bf16.gmra.mxu0 %v1048
      %v1099 = vpop.f32.mrf.mxu0
      %v1100 = vadd.f32 %v997, %v1099
      %v1101 = vpop.f32.mrf.mxu0
      %v1102 = vadd.f32 %v997, %v1101
      %v1103 = vpop.f32.mrf.mxu0
      %v1104 = vadd.f32 %v1002, %v1103
      %v1105 = vpop.f32.mrf.mxu0
      %v1106 = vadd.f32 %v1002, %v1105
      %1107 = vmatprep.mubr.bf16.mxu0 0
      %1108 = vmatmul.mubr.bf16.gmra.mxu0 %v1051
      %v1109 = vpop.f32.mrf.mxu0
      %v1110 = vadd.f32 %v1007, %v1109
      %v1111 = vpop.f32.mrf.mxu0
      %v1112 = vadd.f32 %v1007, %v1111
      %v1113 = vpop.f32.mrf.mxu0
      %v1114 = vadd.f32 %v1012, %v1113
      %v1115 = vpop.f32.mrf.mxu0
      %v1116 = vadd.f32 %v1012, %v1115
      %1117 = vmatprep.mubr.bf16.mxu0 0
      %1118 = vmatmul.mubr.bf16.gmra.mxu0 %v1054
      %v1119 = vpop.f32.mrf.mxu0
      %v1120 = vadd.f32 %v1017, %v1119
      %v1121 = vpop.f32.mrf.mxu0
      %v1122 = vadd.f32 %v1017, %v1121
      %v1123 = vpop.f32.mrf.mxu0
      %v1124 = vadd.f32 %v1022, %v1123
      %v1125 = vpop.f32.mrf.mxu0
      %v1126 = vadd.f32 %v1022, %v1125
      %1127 = vmatprep.mubr.bf16.mxu0 0
      %1128 = vmatmul.mubr.bf16.gmra.mxu0 %v1057
      %v1129 = vpop.f32.mrf.mxu0
      %v1130 = vadd.f32 %v1027, %v1129
      %v1131 = vpop.f32.mrf.mxu0
      %v1132 = vadd.f32 %v1027, %v1131
      %v1133 = vpop.f32.mrf.mxu0
      %v1134 = vpop.f32.mrf.mxu0
      %1135 = vdwg.mxu0
      %v1136 = vmax.f32 %v1100, 0.0
      %v1137 = vmax.f32 %v1102, 0.0
      %v1138 = vmax.f32 %v1104, 0.0
      %v1139 = vmax.f32 %v1106, 0.0
      %v1140 = vmax.f32 %v1110, 0.0
      %v1141 = vmax.f32 %v1112, 0.0
      %v1142 = vmax.f32 %v1114, 0.0
      %v1143 = vmax.f32 %v1116, 0.0
      %v1144 = vmax.f32 %v1120, 0.0
      %v1145 = vmax.f32 %v1122, 0.0
      %v1146 = vmax.f32 %v1124, 0.0
      %v1147 = vmax.f32 %v1126, 0.0
      %v1148 = vmax.f32 %v1130, 0.0
      %v1149 = vmax.f32 %v1132, 0.0
      %v1150 = vadd.f32 %v1136, %v966
      %v1151 = vadd.f32 %v1137, %v967
      %v1152 = vadd.f32 %v1138, %v968
      %v1153 = vadd.f32 %v1139, %v969
      %v1154 = vadd.f32 %v1140, %v970
      %v1155 = vadd.f32 %v1141, %v971
      %v1156 = vadd.f32 %v1142, %v972
      %v1157 = vadd.f32 %v1143, %v973
      %v1158 = vadd.f32 %v1144, %v974
      %v1159 = vadd.f32 %v1145, %v975
      %v1160 = vadd.f32 %v1146, %v976
      %v1161 = vadd.f32 %v1147, %v977
      %v1162 = vadd.f32 %v1148, %v978
      %v1163 = vadd.f32 %v1149, %v979
      %v1164 = vld [vmem:[%s8] sm:$0xff]
      %v1165 = vld [vmem:[%s8 + $0x8] sm:$0xff]
      %v1166 = vld [vmem:[%s8 + $0x10] sm:$0xff]
      %v1167 = vld [vmem:[%s8 + $0x18] sm:$0xff]
      %v1168 = vld [vmem:[%s8 + $0x20] sm:$0xff]
      %v1169 = vld [vmem:[%s8 + $0x28] sm:$0xff]
      %v1170 = vld [vmem:[%s8 + $0x30] sm:$0x3]
      %1172 = vset.pattern.permute.xlu0 0
      %1173 = vperm.xlu0 %1172, %v1164
      %v1174 = vpop.permute.xlu0 %1173
      %1177 = vset.pattern.permute.xlu0 0
      %1178 = vperm.xlu0 %1177, %v1165
      %v1179 = vpop.permute.xlu0 %1178
      %1182 = vset.pattern.permute.xlu0 0
      %1183 = vperm.xlu0 %1182, %v1166
      %v1184 = vpop.permute.xlu0 %1183
      %1187 = vset.pattern.permute.xlu0 0
      %1188 = vperm.xlu0 %1187, %v1167
      %v1189 = vpop.permute.xlu0 %1188
      %1192 = vset.pattern.permute.xlu0 0
      %1193 = vperm.xlu0 %1192, %v1168
      %v1194 = vpop.permute.xlu0 %1193
      %1197 = vset.pattern.permute.xlu0 0
      %1198 = vperm.xlu0 %1197, %v1169
      %v1199 = vpop.permute.xlu0 %1198
      %1202 = vset.pattern.permute.xlu0 0
      %1203 = vperm.xlu0 %1202, %v1170
      %v1204 = vpop.permute.xlu0 %1203
      %v1206 = vmul.f32 %v1150, %v1174
      %v1207 = vmul.f32 %v1151, %v1174
      %v1208 = vmul.f32 %v1152, %v1179
      %v1209 = vmul.f32 %v1153, %v1179
      %v1210 = vmul.f32 %v1154, %v1184
      %v1211 = vmul.f32 %v1155, %v1184
      %v1212 = vmul.f32 %v1156, %v1189
      %v1213 = vmul.f32 %v1157, %v1189
      %v1214 = vmul.f32 %v1158, %v1194
      %v1215 = vmul.f32 %v1159, %v1194
      %v1216 = vmul.f32 %v1160, %v1199
      %v1217 = vmul.f32 %v1161, %v1199
      %v1218 = vmul.f32 %v1162, %v1204
      %v1219 = vmul.f32 %v1163, %v1204
      %v1220 = vadd.f32 %v1206, %v1208
      %v1221 = vadd.f32 %v1220, %v1210
      %v1222 = vadd.f32 %v1221, %v1212
      %v1223 = vadd.f32 %v1222, %v1214
      %v1224 = vadd.f32 %v1223, %v1216
      %v1225 = vsel %vm662, %v1218, 0.0
      %v1226 = vadd.f32 %v1224, %v1225
      %v1227 = vrot.slane %v1226, 4
      %v1228 = vadd.f32 %v1226, %v1227
      %v1229 = vrot.slane %v1228, 2
      %v1230 = vadd.f32 %v1228, %v1229
      %v1231 = vrot.slane %v1230, 1
      %v1232 = vadd.f32 %v1230, %v1231
      %v1233 = vadd.f32 %v1207, %v1209
      %v1234 = vadd.f32 %v1233, %v1211
      %v1235 = vadd.f32 %v1234, %v1213
      %v1236 = vadd.f32 %v1235, %v1215
      %v1237 = vadd.f32 %v1236, %v1217
      %v1238 = vsel %vm662, %v1219, 0.0
      %v1239 = vadd.f32 %v1237, %v1238
      %v1240 = vrot.slane %v1239, 4
      %v1241 = vadd.f32 %v1239, %v1240
      %v1242 = vrot.slane %v1241, 2
      %v1243 = vadd.f32 %v1241, %v1242
      %v1244 = vrot.slane %v1243, 1
      %v1245 = vadd.f32 %v1243, %v1244
      %v1246 = vld [vmem:[#allocation2] sm:$0x1]
      %1248 = vset.pattern.permute.xlu0 0
      %1249 = vperm.xlu0 %1248, %v1246
      %v1250 = vpop.permute.xlu0 %1249
      %v1252 = vlaneseq
      %v1253 = vshrl.u32 %v1252, 7
      %v1254 = vsub.s32 0, %v1253
      %v1255 = vrot.slane %v1250, %v1254
      %v1256 = vadd.f32 %v1232, %v1255
      %v1257 = vadd.f32 %v1245, %v1255
      %v1258 = vmax.f32 %v1256, 0.0
      %v1259 = vmax.f32 %v1257, 0.0
      %v1262 = vcombine.low %v1258, %v1259
      %v1264 = vunpack.c.l.s4 1966171168
      %v1265 = vunpack.c.0.s8 %v1264
      %v1266 = vlaneseq
      %v1267 = vshrl.u32 %v1266, 7
      %v1268 = vsub.s32 %v1265, %v1267
      %v1269 = vrot.slane %v1262, %v1268
      %v1271 = vunpack.c.l.s4 1966171168
      %v1272 = vunpack.c.0.s8 %v1271
      %v1273 = vlaneseq
      %v1274 = vshrl.u32 %v1273, 7
      %v1275 = vsub.s32 %v1272, %v1274
      %v1276 = vrot.slane %v1269, %v1275
      %v1278 = vlaneseq
      %vm1279 = vcmp.ge.s32.totalorder %v1278, 0
      %vm1280 = vcmp.lt.s32.totalorder %v1278, 256
      %vm1281 = vmand %vm1279, %vm1280
      %1282 = vst.msk [vmem:[%s433] sm:$0x3] %vm1281, %v1276
      %s1283 = smul.u32 2, %s28
      %p1284 = scmp.lt.s32.totalorder %s27, 1
      %s1285 = scalar_select %p1284, %s27, 1
      %p1286 = scmp.lt.s32.totalorder %s1283, 1
      %s1287 = scalar_select %p1286, %s1283, 1
      %s1288 = smul.addr %s1285, 2
      %s1289 = sadd.s32 %s1287, %s1288
      %s1290 = scalar_lea.vmem %s10, %s1289
      // Predicated region
      $region61: #{searchnet_forward.1} parent=59 // pred_check
        %p1291 = pneg %p279
      $region62: #{searchnet_forward.1} parent=59 // pred_check_branch
        %1293 = sbr.rel (%p1291) target = $region64
      $region63: #{searchnet_forward.1} parent=59 // pred_region
        %s1294 = smul.u32 2, %s28
      $region64: #{searchnet_forward.1} parent=59 // pred_fallthru
        _
    $region60: #{searchnet_forward.1} parent=5 // pred_fallthru
      _
    %p1295 = scmp.le.s32.totalorder 2, %s18
    // Predicated region
    $region65: #{searchnet_forward.1} parent=5 // pred_check
      %p1296 = pneg %p1295
    $region66: #{searchnet_forward.1} parent=5 // pred_check_branch
      %1298 = sbr.rel (%p1296) target = $region68
    $region67: #{searchnet_forward.1} parent=5 // pred_region
      %s1299 = ssub.s32 %s18, 2
      // Predicated region
      $region69: #{searchnet_forward.1} parent=67 // pred_check
        %p1300 = pneg %p285
      $region70: #{searchnet_forward.1} parent=67 // pred_check_branch
        %1302 = sbr.rel (%p1300) target = $region72
      $region71: #{searchnet_forward.1} parent=67 // pred_region
        %s1303 = smul.u32 2, %s30
        %p1304 = scmp.lt.s32.totalorder %s29, 1
        %s1305 = scalar_select %p1304, %s29, 1
        %p1306 = scmp.lt.s32.totalorder %s1303, 1
        %s1307 = scalar_select %p1306, %s1303, 1
        %s1308 = smul.addr %s1305, 2
        %s1309 = sadd.s32 %s1307, %s1308
        %s1310 = scalar_lea.vmem %s10, %s1309
      $region72: #{searchnet_forward.1} parent=67 // pred_fallthru
        _
    $region68: #{searchnet_forward.1} parent=5 // pred_fallthru
      _
  $region6: #{searchnet_forward.1} parent=0 // loop_footer
    %s22 = sadd.s32 1, %s18
  $region7: #{searchnet_forward.1} parent=0 // loop_footer_branch
    %17 = sbr.rel target = $region3
  $region8: #{searchnet_forward.1} parent=0 // loop_exit
    _

</llo_original>
